<compile_context>
chip_gen: v5e
topology: v5e:2x2
jax: 0.10.0
libtpu: 0.0.40
codegen_flags: <defaults>
</compile_context>

<pallas_src>
import functools
import math

import jax
import jax.numpy as jnp
from jax import lax
from jax.experimental import pallas as pl
from jax.experimental.pallas import tpu as pltpu


# rel_shift ladder element dtype.  f32 is the safe default on every
# generation; on v6e/v7x (bf16 VPU) this can be flipped to jnp.bfloat16 to
# halve the XLU/VALU element traffic of the rel_shift phase.
_REL_SHIFT_DTYPE = jnp.float32


@functools.lru_cache(maxsize=None)
def _vmem_limit_bytes():
    """Scoped-VMEM request: generous on 128 MiB parts, conservative on v7x."""
    try:
        cap = getattr(pltpu.get_tpu_info(), "vmem_capacity_bytes", None)
    except Exception:  # pragma: no cover - e.g. interpret mode / no TPU query
        cap = None
    if not cap:
        return 64 * 1024 * 1024
    return int(min(max(cap - 16 * 1024 * 1024, 32 * 1024 * 1024),
                   100 * 1024 * 1024))


# ----------------------------------------------------------------------------
# Generic dense linear:  y = x @ W^T + b   (W passed pre-transposed, bf16)
# ----------------------------------------------------------------------------
def _linear_kernel(x_ref, w_ref, b_ref, o_ref):
    y = jnp.dot(x_ref[...].astype(jnp.bfloat16), w_ref[...],
                preferred_element_type=jnp.float32) + b_ref[...]
    o_ref[...] = y.astype(o_ref.dtype)


def _pick_row_tile(m):
    cands = (1024, 512, 256, 128, 64, 32, 16, 8)
    for t in cands:                       # prefer an exact divisor (no padding)
        if t <= m and m % t == 0:
            return t
    for t in cands:                       # otherwise: largest tile <= m, pad
        if t <= m:
            return t
    return 8


def _pad_rows(x2d, tm):
    m = x2d.shape[0]
    mp = -(-m // tm) * tm
    if mp != m:
        x2d = jnp.pad(x2d, ((0, mp - m), (0, 0)))
    return x2d, mp


def pallas_linear(x2d, w_t_bf16, b, out_dtype=jnp.float32):
    """x2d: (M, Fin); w_t_bf16: (Fin, Fout) bf16; b: (Fout,) f32."""
    M, Fin = x2d.shape
    Fout = w_t_bf16.shape[1]
    tm = _pick_row_tile(M)
    x2d, Mp = _pad_rows(x2d, tm)
    out = pl.pallas_call(
        _linear_kernel,
        out_shape=jax.ShapeDtypeStruct((Mp, Fout), out_dtype),
        grid=(Mp // tm,),
        in_specs=[
            pl.BlockSpec((tm, Fin), lambda i: (i, 0)),
            pl.BlockSpec((Fin, Fout), lambda i: (0, 0)),
            pl.BlockSpec((1, Fout), lambda i: (0, 0)),
        ],
        out_specs=pl.BlockSpec((tm, Fout), lambda i: (i, 0)),
        compiler_params=pltpu.CompilerParams(
            dimension_semantics=("parallel",),
            vmem_limit_bytes=_vmem_limit_bytes(),
        ),
    )(x2d, w_t_bf16, b.reshape(1, Fout).astype(jnp.float32))
    return out[:M] if Mp != M else out


# ----------------------------------------------------------------------------
# Q projection: one matmul, two scaled/biased bf16 outputs [q_u | q_v]
# ----------------------------------------------------------------------------
def _make_q_proj_kernel(scale):
    def kernel(x_ref, w_ref, bu_ref, bv_ref, o_ref):
        y = jnp.dot(x_ref[...].astype(jnp.bfloat16), w_ref[...],
                    preferred_element_type=jnp.float32)          # (tm, F) f32
        qu = ((y + bu_ref[...]) * scale).astype(jnp.bfloat16)
        qv = ((y + bv_ref[...]) * scale).astype(jnp.bfloat16)
        o_ref[...] = jnp.concatenate([qu, qv], axis=-1)          # one store
    return kernel


def pallas_q_proj(x2d, wq_bf16, bu_row, bv_row, scale):
    """x2d: (M, F) f32 -> (M, 2F) bf16 = [ (q+bu)*s | (q+bv)*s ]."""
    M, Fin = x2d.shape
    F = wq_bf16.shape[1]
    tm = _pick_row_tile(M)
    x2d, Mp = _pad_rows(x2d, tm)
    out = pl.pallas_call(
        _make_q_proj_kernel(scale),
        out_shape=jax.ShapeDtypeStruct((Mp, 2 * F), jnp.bfloat16),
        grid=(Mp // tm,),
        in_specs=[
            pl.BlockSpec((tm, Fin), lambda i: (i, 0)),
            pl.BlockSpec((Fin, F), lambda i: (0, 0)),
            pl.BlockSpec((1, F), lambda i: (0, 0)),
            pl.BlockSpec((1, F), lambda i: (0, 0)),
        ],
        out_specs=pl.BlockSpec((tm, 2 * F), lambda i: (i, 0)),
        compiler_params=pltpu.CompilerParams(
            dimension_semantics=("parallel",),
            vmem_limit_bytes=_vmem_limit_bytes(),
        ),
    )(x2d, wq_bf16, bu_row, bv_row)
    return out[:M] if Mp != M else out


# ----------------------------------------------------------------------------
# Relative-position attention core (all heads per step, T1 tiled)
# ----------------------------------------------------------------------------
def _make_attn_kernel(n_head, d_k, t1_total, tq):
    H, D = n_head, d_k
    F = H * D
    n_bits = max(1, (t1_total - 1).bit_length())
    contract_last = (((1,), (1,)), ((), ()))

    def kernel(quv_ref, kv_ref, p_ref, mask_ref, o_ref):
        T2 = kv_ref.shape[0]
        NposP = p_ref.shape[0]
        qi = pl.program_id(1)

        q_u = quv_ref[:, :F]                     # (tq, F) bf16 (scale folded)
        q_v = quv_ref[:, F:]                     # (tq, F) bf16
        k = kv_ref[:, :F]                        # (T2, F) bf16
        v = kv_ref[:, F:]                        # (T2, F) bf16
        p = p_ref[...]                           # (NposP, F) bf16
        key_masked = mask_ref[...] == 0          # (1|tq, T2) bool

        # --- per-head score matmuls (MXU), results stacked along sublanes ---
        ac_list, bd_list = [], []
        for h in range(H):
            sl = slice(h * D, (h + 1) * D)
            ac_list.append(lax.dot_general(
                q_u[:, sl], k[:, sl], contract_last,
                preferred_element_type=jnp.float32))             # (tq, T2)
            bd_list.append(lax.dot_general(
                q_v[:, sl], p[:, sl], contract_last,
                preferred_element_type=jnp.float32)
                .astype(_REL_SHIFT_DTYPE))                       # (tq, NposP)
        ac_all = jnp.concatenate(ac_list, axis=0)                # (H*tq, T2)
        bd_all = jnp.concatenate(bd_list, axis=0)                # (H*tq, NposP)

        # --- rel_shift: bd_shift[i, j] = bd[i, (T1-1-i) + j] -----------------
        # Per-row cyclic LEFT rotation by s_i = (T1-1) - i_global, realized as
        # one barrel-shifter ladder (uniform rolls + per-row selects) applied
        # to the head-stacked array.  Needed indices never wrap because
        # NposP >= T1 + T2 - 1 (padded lanes are zero and never selected).
        row = lax.broadcasted_iota(jnp.int32, (H * tq, 1), 0) % tq
        shift_amt = (t1_total - 1) - (qi * tq + row)             # (H*tq, 1)
        bit_masks = [((shift_amt & (1 << b)) != 0) for b in range(n_bits)]
        for b in range(n_bits):
            step = 1 << b
            rolled = pltpu.roll(bd_all, NposP - step, 1)         # left by step
            bd_all = jnp.where(bit_masks[b], rolled, bd_all)

        scores = ac_all + bd_all[:, :T2].astype(jnp.float32)     # (H*tq, T2)

        # --- batched masked softmax (f32, EUP approx reciprocal) -------------
        if key_masked.shape[0] == 1:
            km = key_masked                                      # broadcasts
        else:
            km = jnp.tile(key_masked, (H, 1))                    # (H*tq, T2)
        s_max = jnp.max(scores, axis=-1, keepdims=True)
        e = jnp.exp(scores - s_max)
        e = jnp.where(km, 0.0, e)        # exact 0 on masked keys (torch fill)
        denom = jnp.maximum(jnp.sum(e, axis=-1, keepdims=True), 1e-30)
        attn = (e * pl.reciprocal(denom, approx=True)).astype(jnp.bfloat16)

        # --- context: per-head attn@V, ONE lane-dense (tq, F) store ----------
        ctx = [jnp.dot(attn[h * tq:(h + 1) * tq, :], v[:, h * D:(h + 1) * D],
                       preferred_element_type=jnp.float32)
               for h in range(H)]
        o_ref[...] = jnp.concatenate(ctx, axis=-1).astype(o_ref.dtype)

    return kernel


def _pick_q_tile(t1):
    for t in (128, 64, 32, 16, 8):
        if t1 % t == 0:
            return t
    return t1  # T1 not a multiple of 8: single full-extent block over time1


def pallas_rel_attention(quv, kv, p_pad, mask_i32, n_head, d_k):
    """quv: (B,T1,2F) bf16; kv: (B,T2,2F) bf16; p_pad: (NposP,F) bf16;
    mask_i32: (B, 1|T1, T2) int32.  Returns (B, T1, F) bf16 context."""
    B, T1, F2 = quv.shape
    F = F2 // 2
    T2 = kv.shape[1]
    NposP = p_pad.shape[0]
    Tm = mask_i32.shape[1]
    tq = _pick_q_tile(T1)

    if Tm == 1:
        mask_spec = pl.BlockSpec((None, 1, T2), lambda b, qi: (b, 0, 0))
    else:
        mask_spec = pl.BlockSpec((None, tq, T2), lambda b, qi: (b, qi, 0))

    return pl.pallas_call(
        _make_attn_kernel(n_head, d_k, T1, tq),
        out_shape=jax.ShapeDtypeStruct((B, T1, F), jnp.bfloat16),
        grid=(B, T1 // tq),
        in_specs=[
            pl.BlockSpec((None, tq, 2 * F), lambda b, qi: (b, qi, 0)),
            pl.BlockSpec((None, T2, 2 * F), lambda b, qi: (b, 0, 0)),
            pl.BlockSpec((NposP, F), lambda b, qi: (0, 0)),
            mask_spec,
        ],
        out_specs=pl.BlockSpec((None, tq, F), lambda b, qi: (b, qi, 0)),
        compiler_params=pltpu.CompilerParams(
            dimension_semantics=("parallel", "parallel"),
            vmem_limit_bytes=_vmem_limit_bytes(),
        ),
    )(quv, kv, p_pad, mask_i32)


# ----------------------------------------------------------------------------
# Full module forward (default args: no cache, no limited-context chunking)
# ----------------------------------------------------------------------------
def chunk_attention_forward(params, query, key, value, mask, pos_emb,
                            cache=None):
    H, D = params["pos_bias_u"].shape
    B, T1, F = query.shape
    T2 = key.shape[1]
    Npos = pos_emb.shape[1]
    assert F == H * D
    assert Npos >= T1 + T2 - 1  # torch as_strided rel_shift stays in-row

    bf16 = jnp.bfloat16
    scale = 1.0 / math.sqrt(D)

    wq = params["wq_t"].astype(bf16)
    wk = params["wk_t"].astype(bf16)
    wv = params["wv_t"].astype(bf16)
    wp = params["wp_t"].astype(bf16)
    wo = params["wo_t"].astype(bf16)

    # Q projection with pos_bias_u / pos_bias_v and 1/sqrt(d_k) folded in:
    # one matmul, dual bf16 output [q_u | q_v].
    bu_row = (params["bq"] + params["pos_bias_u"].reshape(F)).reshape(1, F)
    bv_row = (params["bq"] + params["pos_bias_v"].reshape(F)).reshape(1, F)
    quv = pallas_q_proj(query.reshape(B * T1, F), wq, bu_row, bv_row, scale)
    quv = quv.reshape(B, T1, 2 * F)

    # K / V projections fused into a single launch when key is value
    # (reads `key` from HBM once); bf16 outputs halve projection writeback.
    if key is value:
        wkv = jnp.concatenate([wk, wv], axis=1)                  # (F, 2F)
        bkv = jnp.concatenate([params["bk"], params["bv"]])
        kv = pallas_linear(key.reshape(B * T2, F), wkv, bkv, out_dtype=bf16)
        kv = kv.reshape(B, T2, 2 * F)
    else:
        k = pallas_linear(key.reshape(B * T2, F), wk, params["bk"],
                          out_dtype=bf16).reshape(B, T2, F)
        v = pallas_linear(value.reshape(B * T2, F), wv, params["bv"],
                          out_dtype=bf16).reshape(B, T2, F)
        kv = jnp.concatenate([k, v], axis=-1)

    # linear_pos (bias-free), bf16 output.  Pad the position axis to a
    # lane-aligned width so in-kernel rel_shift rolls act on full 128-lane
    # registers; padded rows project to zero and are never selected.
    npos_pad = max(128, -(-Npos // 128) * 128)
    pos_flat = jnp.pad(pos_emb[0], ((0, npos_pad - Npos), (0, 0)))
    p_pad = pallas_linear(pos_flat, wp, jnp.zeros((F,), jnp.float32),
                          out_dtype=bf16)                        # (NposP, F)

    # Mask: (B, 1, T2) key-padding or (B, T1, T2); empty mask => attend all.
    if mask is None or mask.ndim != 3 or mask.shape[1] == 0 or mask.shape[2] == 0:
        mask_i32 = jnp.ones((B, 1, T2), jnp.int32)
    else:
        mask_i32 = mask[:, :, :T2].astype(jnp.int32)
    assert mask_i32.shape[1] in (1, T1)

    # Attention core: grid over (batch, q-tile), all heads per step.
    ctx = pallas_rel_attention(quv, kv, p_pad, mask_i32, H, D)   # (B,T1,F) bf16

    # linear_out consumes ctx directly (no head transpose / HBM relayout).
    out = pallas_linear(ctx.reshape(B * T1, F), wo, params["bo"],
                        out_dtype=jnp.float32).reshape(B, T1, F)

    # Default path: new_cache == cache (empty).
    new_cache = cache if cache is not None else jnp.zeros((0, 0, 0, 0),
                                                          jnp.float32)
    return out, new_cache


# ----------------------------------------------------------------------------
# Pure-JAX reference (mirrors the PyTorch math; same bf16 MXU rounding points,
# rel_shift done independently via take_along_axis) for verification.
# ----------------------------------------------------------------------------
def reference_forward(params, query, key, value, mask, pos_emb):
    H, D = params["pos_bias_u"].shape
    B, T1, F = query.shape
    T2 = key.shape[1]
    Npos = pos_emb.shape[1]
    bf16 = jnp.bfloat16
    scale = 1.0 / math.sqrt(D)

    def lin(x, w_t, b):
        y = jnp.dot(x.astype(bf16), w_t.astype(bf16),
                    preferred_element_type=jnp.float32)
        return y + b

    q = lin(query, params["wq_t"], params["bq"]).reshape(B, T1, H, D)
    k = lin(key, params["wk_t"], params["bk"]).reshape(B, T2, H, D)
    v = lin(value, params["wv_t"], params["bv"]).reshape(B, T2, H, D)
    p = lin(pos_emb[0], params["wp_t"], 0.0).reshape(Npos, H, D)

    q_u = ((q + params["pos_bias_u"][None, None]) * scale).astype(bf16)
    q_v = ((q + params["pos_bias_v"][None, None]) * scale).astype(bf16)
    ac = jnp.einsum("bthd,bshd->bhts", q_u, k.astype(bf16),
                    preferred_element_type=jnp.float32)
    bd = jnp.einsum("bthd,nhd->bhtn", q_v, p.astype(bf16),
                    preferred_element_type=jnp.float32)

    idx = (T1 - 1) - jnp.arange(T1)[:, None] + jnp.arange(T2)[None, :]
    bd_s = jnp.take_along_axis(
        bd, jnp.broadcast_to(idx[None, None], (B, H, T1, T2)), axis=-1)
    scores = ac + bd_s

    m = mask[:, None, :, :] == 0                                 # (B,1,Tm,T2)
    scores = jnp.where(m, -jnp.inf, scores)
    attn = jax.nn.softmax(scores, axis=-1)
    attn = jnp.where(m, 0.0, attn)

    ctx = jnp.einsum("bhts,bshd->bthd", attn.astype(bf16), v.astype(bf16),
                     preferred_element_type=jnp.float32)
    x = ctx.reshape(B, T1, H * D)
    return jnp.dot(x.astype(bf16), params["wo_t"].astype(bf16),
                   preferred_element_type=jnp.float32) + params["bo"]


# ----------------------------------------------------------------------------
def make_params(key_param, n_head, n_feat):
    d_k = n_feat // n_head
    ks = jax.random.split(key_param, 10)
    std = math.sqrt(2.0 / (n_feat + n_feat))
    std_b = math.sqrt(2.0 / (n_head + d_k))

    def w(k):
        return jax.random.normal(k, (n_feat, n_feat), jnp.float32) * std

    return {
        # weights stored pre-transposed: y = x @ W_t + b  ==  torch Linear(x)
        "wq_t": w(ks[0]), "bq": jax.random.normal(ks[1], (n_feat,), jnp.float32) * 0.02,
        "wk_t": w(ks[2]), "bk": jax.random.normal(ks[3], (n_feat,), jnp.float32) * 0.02,
        "wv_t": w(ks[4]), "bv": jax.random.normal(ks[5], (n_feat,), jnp.float32) * 0.02,
        "wo_t": w(ks[6]), "bo": jax.random.normal(ks[7], (n_feat,), jnp.float32) * 0.02,
        "wp_t": w(ks[8]),  # linear_pos, bias=False
        "pos_bias_u": jax.random.normal(ks[9], (n_head, d_k), jnp.float32) * std_b,
        "pos_bias_v": jax.random.normal(jax.random.fold_in(ks[9], 1),
                                        (n_head, d_k), jnp.float32) * std_b,
    }


if __name__ == "__main__":
    # Small shapes consistent with the module's forward (self-attention).
    B, T, n_feat, n_head = 2, 16, 128, 4
    Npos = 2 * T - 1  # pos_emb length for rel_shift with zero left/right context

    root = jax.random.PRNGKey(0)
    kp, kx, kpos = jax.random.split(root, 3)
    params = make_params(kp, n_head, n_feat)

    x = jax.random.normal(kx, (B, T, n_feat), jnp.float32)
    pos_emb = jax.random.normal(kpos, (1, Npos, n_feat), jnp.float32)

    # key-padding mask (B, 1, T2): batch 1 has its last three frames masked out
    mask = jnp.ones((B, 1, T), dtype=bool)
    mask = mask.at[1, 0, -3:].set(False)

    out, new_cache = chunk_attention_forward(params, x, x, x, mask, pos_emb)
    out = jax.block_until_ready(out)

    ref = reference_forward(params, x, x, x, mask, pos_emb)
    err = float(jnp.max(jnp.abs(out - ref)))
    ref_scale = float(jnp.max(jnp.abs(ref)))

    assert out.shape == (B, T, n_feat)
    assert new_cache.shape == (0, 0, 0, 0)
    assert bool(jnp.all(jnp.isfinite(out))), "non-finite output"
    tol = 2e-2 + 2e-2 * max(1.0, ref_scale)
    assert err < tol, f"mismatch vs reference: max abs err = {err} (tol {tol})"

    print("KERNEL_OK")
</pallas_src>

<mosaic_0001>
module attributes {stable_mosaic.version = 11 : i64} {
  func.func @kernel(%arg0: i32, %arg1: memref<32x128xf32, #tpu.memory_space<vmem>>, %arg2: memref<128x128xbf16, #tpu.memory_space<vmem>>, %arg3: memref<1x128xf32, #tpu.memory_space<vmem>>, %arg4: memref<1x128xf32, #tpu.memory_space<vmem>>, %arg5: memref<32x256xbf16, #tpu.memory_space<vmem>>) attributes {dimension_semantics = [#tpu.dimension_semantics<parallel>], iteration_bounds = array<i64: 1>, scalar_prefetch = 0 : i64, scratch_operands = 0 : i64, tpu.core_type = #tpu.core_type<tc>, window_params = [{transform_indices = @transform_0, window_bounds = array<i64: 32, 128>}, {pipeline_mode = #tpu.pipeline_mode<synchronous>, transform_indices = @transform_1, window_bounds = array<i64: 128, 128>}, {pipeline_mode = #tpu.pipeline_mode<synchronous>, transform_indices = @transform_2, window_bounds = array<i64: 1, 128>}, {pipeline_mode = #tpu.pipeline_mode<synchronous>, transform_indices = @transform_3, window_bounds = array<i64: 1, 128>}, {transform_indices = @transform_4, window_bounds = array<i64: 32, 256>}]} {
    %c0 = arith.constant 0 : index
    %c0_0 = arith.constant 0 : index
    %0 = vector.load %arg1[%c0, %c0_0] : memref<32x128xf32, #tpu.memory_space<vmem>>, vector<32x128xf32>
    %1 = arith.truncf %0 : vector<32x128xf32> to vector<32x128xbf16>
    %c0_1 = arith.constant 0 : index
    %c0_2 = arith.constant 0 : index
    %2 = vector.load %arg2[%c0_1, %c0_2] : memref<128x128xbf16, #tpu.memory_space<vmem>>, vector<128x128xbf16>
    %cst = arith.constant dense<0.000000e+00> : vector<32x128xf32>
    %3 = tpu.matmul %1, %2, %cst {dimension_numbers = #tpu.dot_dimension_numbers<[1], [0], [0], [1], [0, 0, 1, 1], [], []>} : vector<32x128xbf16>, vector<128x128xbf16>, vector<32x128xf32> -> vector<32x128xf32>
    %c0_3 = arith.constant 0 : index
    %c0_4 = arith.constant 0 : index
    %4 = vector.load %arg3[%c0_3, %c0_4] : memref<1x128xf32, #tpu.memory_space<vmem>>, vector<1x128xf32>
    %5 = vector.broadcast %4 : vector<1x128xf32> to vector<32x128xf32>
    %6 = arith.addf %3, %5 : vector<32x128xf32>
    %cst_5 = arith.constant 0.176776692 : f32
    %7 = vector.broadcast %cst_5 : f32 to vector<32x128xf32>
    %8 = arith.mulf %6, %7 : vector<32x128xf32>
    %9 = arith.truncf %8 : vector<32x128xf32> to vector<32x128xbf16>
    %c0_6 = arith.constant 0 : index
    %c0_7 = arith.constant 0 : index
    %10 = vector.load %arg4[%c0_6, %c0_7] : memref<1x128xf32, #tpu.memory_space<vmem>>, vector<1x128xf32>
    %11 = vector.broadcast %10 : vector<1x128xf32> to vector<32x128xf32>
    %12 = arith.addf %3, %11 : vector<32x128xf32>
    %cst_8 = arith.constant 0.176776692 : f32
    %13 = vector.broadcast %cst_8 : f32 to vector<32x128xf32>
    %14 = arith.mulf %12, %13 : vector<32x128xf32>
    %15 = arith.truncf %14 : vector<32x128xf32> to vector<32x128xbf16>
    %16 = tpu.concatenate %9, %15 in 1 : vector<32x128xbf16>, vector<32x128xbf16> -> vector<32x256xbf16>
    %c0_9 = arith.constant 0 : index
    %c0_10 = arith.constant 0 : index
    %17 = vector.load %arg5[%c0_9, %c0_10] : memref<32x256xbf16, #tpu.memory_space<vmem>>, vector<32x256xbf16>
    tpu.vector_store %arg5[%c0_9, %c0_10], %16 {strides = array<i32>} : memref<32x256xbf16, #tpu.memory_space<vmem>>, vector<32x256xbf16>,
    return
  }
  func.func @transform_0(%arg0: i32) -> (i32, i32) {
    %c0_i32 = arith.constant 0 : i32
    %c0_i32_0 = arith.constant 0 : i32
    return %arg0, %c0_i32 : i32, i32
  }
  func.func @transform_1(%arg0: i32) -> (i32, i32) {
    %c0_i32 = arith.constant 0 : i32
    %c0_i32_0 = arith.constant 0 : i32
    %c0_i32_1 = arith.constant 0 : i32
    return %c0_i32, %c0_i32_0 : i32, i32
  }
  func.func @transform_2(%arg0: i32) -> (i32, i32) {
    %c0_i32 = arith.constant 0 : i32
    %c0_i32_0 = arith.constant 0 : i32
    %c0_i32_1 = arith.constant 0 : i32
    return %c0_i32, %c0_i32_0 : i32, i32
  }
  func.func @transform_3(%arg0: i32) -> (i32, i32) {
    %c0_i32 = arith.constant 0 : i32
    %c0_i32_0 = arith.constant 0 : i32
    %c0_i32_1 = arith.constant 0 : i32
    return %c0_i32, %c0_i32_0 : i32, i32
  }
  func.func @transform_4(%arg0: i32) -> (i32, i32) {
    %c0_i32 = arith.constant 0 : i32
    %c0_i32_0 = arith.constant 0 : i32
    return %arg0, %c0_i32 : i32, i32
  }
}

</mosaic_0001>

<llo_original>
// kernel: tpu_custom_call.1
$region0: #{tpu_custom_call.1}
  #allocation0 [shape = 'u32[]', space=smem, size = 0x4, offset = 0x4, fixed_abs, tag = 'smem constant byte address 0x4 - core index']
  #allocation1 [shape = 'u32[72,128]{1,0:T(1,128)}', space=vmem, size = 0x9000, scoped, tag = 'internal scratch']
  %s0 = inlined_call_operand.hbm [shape: f32[32,128], index: 0, kind: input, shape index: {}]
  %s1 = inlined_call_operand.hbm [shape: bf16[128,128], index: 1, kind: input, shape index: {}]
  %s2 = inlined_call_operand.vmem [shape: f32[1,128], index: 2, kind: input, shape index: {}]
  %s3 = inlined_call_operand.vmem [shape: f32[1,128], index: 3, kind: input, shape index: {}]
  %s4 = inlined_call_operand.hbm [shape: bf16[32,256], index: 4, kind: output, shape index: {}]
  %s5 = sld [smem:[#allocation0]]
  $region34: #{tpu_custom_call.1} parent=0
    _
  %s7 = ssub.s32 1, %s5
  %s8 = scalar_select 0, %s7, %s5
  $region1: #{tpu_custom_call.1} parent=0
    #allocation2 [shape = 'u8[16384]{0}', space=vmem, size = 0x4000, scoped, tag = 'input window, operand 0, single buffered']
    #allocation3 [shape = 's32[1]{0}', space=sflag, size = 0x4, scoped, tag = 'scoped memory for tpu_custom_call.1']
    #allocation4 [shape = 's32[1]{0}', space=sflag, size = 0x4, scoped, tag = 'scoped memory for tpu_custom_call.1']
    #allocation5 [shape = 'u8[32768]{0}', space=vmem, size = 0x8000, scoped, tag = 'input window, operand 1, single buffered']
    #allocation6 [shape = 's32[1]{0}', space=sflag, size = 0x4, scoped, tag = 'scoped memory for tpu_custom_call.1']
    #allocation7 [shape = 'u8[16384]{0}', space=vmem, size = 0x4000, scoped, tag = 'output window, operand 0, single buffered']
    %9 = vsyncpa [#allocation3], 0
    %10 = vsyncpa [#allocation6], 0
    %11 = vsyncpa [#allocation4], 0
    // Predicated region
    $region2: #{tpu_custom_call.1} parent=1 // pred_check
      _
    $region3: #{tpu_custom_call.1} parent=1 // pred_check_branch
      %13 = sbr.rel (0) target = $region5
    $region4: #{tpu_custom_call.1} parent=1 // pred_region
      %15 = vsyncadd [#allocation3], 0
      %s16 = sshll.u32 %s0, 4
      %s17 = int_to_ptr.hbm [resolvable:$true] %s16
      %s18 = sshll.u32 [#allocation2], 4
      %s19 = int_to_ptr.vmem [resolvable:$true] %s18
      %24 = dma.hbm_to_vmem [thread:$0]  %s17, 512, %s19, [#allocation3], 128, 128, 8
    $region5: #{tpu_custom_call.1} parent=1 // pred_fallthru
      _
    // Predicated region
    $region6: #{tpu_custom_call.1} parent=1 // pred_check
      _
    $region7: #{tpu_custom_call.1} parent=1 // pred_check_branch
      %26 = sbr.rel (0) target = $region9
    $region8: #{tpu_custom_call.1} parent=1 // pred_region
      %28 = vsyncadd [#allocation6], 0
      %s29 = sshll.u32 %s1, 4
      %s30 = int_to_ptr.hbm [resolvable:$true] %s29
      %s31 = sshll.u32 [#allocation5], 4
      %s32 = int_to_ptr.vmem [resolvable:$true] %s31
      %37 = dma.hbm_to_vmem [thread:$0]  %s30, 1024, %s32, [#allocation6], 64, 64, 4
    $region9: #{tpu_custom_call.1} parent=1 // pred_fallthru
      _
    // Predicated region
    $region10: #{tpu_custom_call.1} parent=1 // pred_check
      _
    $region11: #{tpu_custom_call.1} parent=1 // pred_check_branch
      %39 = sbr.rel (0) target = $region13
    $region12: #{tpu_custom_call.1} parent=1 // pred_region
      _
    $region13: #{tpu_custom_call.1} parent=1 // pred_fallthru
      _
    // Predicated region
    $region14: #{tpu_custom_call.1} parent=1 // pred_check
      _
    $region15: #{tpu_custom_call.1} parent=1 // pred_check_branch
      %41 = sbr.rel (0) target = $region17
    $region16: #{tpu_custom_call.1} parent=1 // pred_region
      _
    $region17: #{tpu_custom_call.1} parent=1 // pred_fallthru
      _
    // Predicated region
    $region18: #{tpu_custom_call.1} parent=1 // pred_check
      _
    $region19: #{tpu_custom_call.1} parent=1 // pred_check_branch
      %43 = sbr.rel (0) target = $region21
    $region20: #{tpu_custom_call.1} parent=1 // pred_region
      %45 = dma.done [#allocation3], 512
    $region21: #{tpu_custom_call.1} parent=1 // pred_fallthru
      _
    // Predicated region
    $region22: #{tpu_custom_call.1} parent=1 // pred_check
      _
    $region23: #{tpu_custom_call.1} parent=1 // pred_check_branch
      %47 = sbr.rel (0) target = $region25
    $region24: #{tpu_custom_call.1} parent=1 // pred_region
      %49 = dma.done [#allocation6], 1024
    $region25: #{tpu_custom_call.1} parent=1 // pred_fallthru
      _
    %v50 = vld [vmem:[#allocation2] sm:$0xff]
    %v51 = vld [vmem:[#allocation2 + $0x8] sm:$0xff]
    %v52 = vld [vmem:[#allocation2 + $0x10] sm:$0xff]
    %v53 = vld [vmem:[#allocation2 + $0x18] sm:$0xff]
    %v54 = vpack.c.bf16 %v51, %v50
    %v55 = vpack.c.bf16 %v53, %v52
    %v56 = vld [vmem:[#allocation5] sm:$0xf]
    %v57 = vld [vmem:[#allocation5 + $0x4] sm:$0xf]
    %v58 = vld [vmem:[#allocation5 + $0x8] sm:$0xf]
    %v59 = vld [vmem:[#allocation5 + $0xc] sm:$0xf]
    %v60 = vld [vmem:[#allocation5 + $0x10] sm:$0xf]
    %v61 = vld [vmem:[#allocation5 + $0x14] sm:$0xf]
    %v62 = vld [vmem:[#allocation5 + $0x18] sm:$0xf]
    %v63 = vld [vmem:[#allocation5 + $0x1c] sm:$0xf]
    %v64 = vld [vmem:[#allocation5 + $0x20] sm:$0xf]
    %v65 = vld [vmem:[#allocation5 + $0x24] sm:$0xf]
    %v66 = vld [vmem:[#allocation5 + $0x28] sm:$0xf]
    %v67 = vld [vmem:[#allocation5 + $0x2c] sm:$0xf]
    %v68 = vld [vmem:[#allocation5 + $0x30] sm:$0xf]
    %v69 = vld [vmem:[#allocation5 + $0x34] sm:$0xf]
    %v70 = vld [vmem:[#allocation5 + $0x38] sm:$0xf]
    %v71 = vld [vmem:[#allocation5 + $0x3c] sm:$0xf]
    %v88 = vunpack.c.l.b16 %v56
    %v89 = vunpack.c.l.b16 %v57
    %v90 = vunpack.c.l.b16 %v58
    %v91 = vunpack.c.l.b16 %v59
    %v92 = vunpack.c.l.b16 %v60
    %v93 = vunpack.c.l.b16 %v61
    %v94 = vunpack.c.l.b16 %v62
    %v95 = vunpack.c.l.b16 %v63
    %v96 = vunpack.c.l.b16 %v64
    %v97 = vunpack.c.l.b16 %v65
    %v98 = vunpack.c.l.b16 %v66
    %v99 = vunpack.c.l.b16 %v67
    %v100 = vunpack.c.l.b16 %v68
    %v101 = vunpack.c.l.b16 %v69
    %v102 = vunpack.c.l.b16 %v70
    %v103 = vunpack.c.l.b16 %v71
    %v104 = vpack.c.b16 %v89, %v88
    %v105 = vpack.c.b16 %v91, %v90
    %v106 = vpack.c.b16 %v93, %v92
    %v107 = vpack.c.b16 %v95, %v94
    %v108 = vpack.c.b16 %v97, %v96
    %v109 = vpack.c.b16 %v99, %v98
    %v110 = vpack.c.b16 %v101, %v100
    %v111 = vpack.c.b16 %v103, %v102
    %120 = vmatpush.bf16.msra.mxu0 %v111
    %121 = vmatpush.bf16.msra.mxu0 %v110
    %122 = vmatpush.bf16.msra.mxu0 %v109
    %123 = vmatpush.bf16.msra.mxu0 %v108
    %124 = vmatpush.bf16.msra.mxu0 %v107
    %125 = vmatpush.bf16.msra.mxu0 %v106
    %126 = vmatpush.bf16.msra.mxu0 %v105
    %127 = vmatpush.bf16.msra.mxu0 %v104
    %128 = vmatmul.bf16.gmra.mxu0 %v54
    %v129 = vpop.f32.mrf.mxu0
    %v130 = vadd.f32 0.0, %v129
    %v131 = vpop.f32.mrf.mxu0
    %v132 = vadd.f32 0.0, %v131
    %133 = vmatmul.bf16.gmra.mxu0 %v55
    %v134 = vpop.f32.mrf.mxu0
    %v135 = vadd.f32 0.0, %v134
    %v136 = vpop.f32.mrf.mxu0
    %v137 = vadd.f32 0.0, %v136
    %138 = vdwg.mxu0
    %v139 = vld [vmem:[%s2] sm:$0x1]
    %v141 = vperm.slane %v139, 0
    %v143 = vadd.f32 %v130, %v141
    %v144 = vadd.f32 %v132, %v141
    %v145 = vadd.f32 %v135, %v141
    %v146 = vadd.f32 %v137, %v141
    %v147 = vmul.f32 %v143, 0.17677669
    %v148 = vmul.f32 %v144, 0.17677669
    %v149 = vmul.f32 %v145, 0.17677669
    %v150 = vmul.f32 %v146, 0.17677669
    %v151 = vpack.c.bf16 %v147, %v147
    %v152 = vpack.c.bf16 %v148, %v148
    %v153 = vpack.c.bf16 %v149, %v149
    %v154 = vpack.c.bf16 %v150, %v150
    %v155 = vld [vmem:[%s3] sm:$0x1]
    %v157 = vperm.slane %v155, 0
    %v159 = vadd.f32 %v130, %v157
    %v160 = vadd.f32 %v132, %v157
    %v161 = vadd.f32 %v135, %v157
    %v162 = vadd.f32 %v137, %v157
    %v163 = vmul.f32 %v159, 0.17677669
    %v164 = vmul.f32 %v160, 0.17677669
    %v165 = vmul.f32 %v161, 0.17677669
    %v166 = vmul.f32 %v162, 0.17677669
    %v167 = vpack.c.bf16 %v163, %v163
    %v168 = vpack.c.bf16 %v164, %v164
    %v169 = vpack.c.bf16 %v165, %v165
    %v170 = vpack.c.bf16 %v166, %v166
    %v175 = vunpack.c.l.b16 %v151
    %v176 = vunpack.c.l.b16 %v152
    %v177 = vunpack.c.l.b16 %v153
    %v178 = vunpack.c.l.b16 %v154
    %v183 = vunpack.c.l.b16 %v167
    %v184 = vunpack.c.l.b16 %v168
    %v185 = vunpack.c.l.b16 %v169
    %v186 = vunpack.c.l.b16 %v170
    %v187 = vpack.c.b16 %v183, %v175
    %v188 = vpack.c.b16 %v184, %v176
    %v189 = vpack.c.b16 %v185, %v177
    %v190 = vpack.c.b16 %v186, %v178
    %195 = vst [vmem:[#allocation7] sm:$0xff] %v187
    %196 = vst [vmem:[#allocation7 + $0x8] sm:$0xff] %v188
    %197 = vst [vmem:[#allocation7 + $0x10] sm:$0xff] %v189
    %198 = vst [vmem:[#allocation7 + $0x18] sm:$0xff] %v190
    // Predicated region
    $region26: #{tpu_custom_call.1} parent=1 // pred_check
      _
    $region27: #{tpu_custom_call.1} parent=1 // pred_check_branch
      %200 = sbr.rel (0) target = $region29
    $region28: #{tpu_custom_call.1} parent=1 // pred_region
      %202 = vsyncadd [#allocation4], 0
      %s203 = sshll.u32 [#allocation7], 4
      %s204 = int_to_ptr.vmem [resolvable:$true] %s203
      %s205 = sshll.u32 %s4, 4
      %s206 = int_to_ptr.hbm [resolvable:$true] %s205
      %211 = dma.vmem_to_hbm [thread:$0]  %s204, 512, %s206, [#allocation4], 128, 128, 8
    $region29: #{tpu_custom_call.1} parent=1 // pred_fallthru
      _
    // Predicated region
    $region30: #{tpu_custom_call.1} parent=1 // pred_check
      _
    $region31: #{tpu_custom_call.1} parent=1 // pred_check_branch
      %213 = sbr.rel (0) target = $region33
    $region32: #{tpu_custom_call.1} parent=1 // pred_region
      %215 = dma.done [#allocation4], 512
    $region33: #{tpu_custom_call.1} parent=1 // pred_fallthru
      _
    %216 = vsyncpa [#allocation3], 1
    %217 = vsyncpa [#allocation6], 1
    %218 = vsyncpa [#allocation4], 1

</llo_original>
